<compile_context>
chip_gen: v6e
topology: v6e:2x2x1
jax: 0.10.0
libtpu: 0.0.40
codegen_flags: <defaults>
</compile_context>

<pallas_src>
import numpy as np
import jax
import jax.numpy as jnp
from jax.experimental import pallas as pl
from jax.experimental.pallas import tpu as pltpu


_LANE_CHOICES = (512, 256, 128)          # lane-dense last dims (multiples of 128)
_VMEM_LIMIT_BYTES = 32 * 1024 * 1024     # safe scoped-VMEM request on v5e/v6e/v7x


def _tpu_generation():
    """Best-effort TPU generation from the device kind string (0 = unknown)."""
    try:
        kind = jax.devices()[0].device_kind.lower()
    except Exception:
        return 0
    for gen in (7, 6, 5, 4, 3, 2):
        if (f"v{gen}" in kind) or (f"{gen}x" in kind) or (f"{gen}e" in kind):
            return gen
    return 0


def _target_tile_bytes(gen):
    # Per-buffer block target (review guidance):
    #   v6e / v7x : ~4 MiB  -> 16 MiB double-buffered in+out footprint
    #   v5e/other : ~2 MiB  ->  8 MiB footprint (fits 16 MiB default scoped VMEM)
    return 4 * 1024 * 1024 if gen >= 6 else 2 * 1024 * 1024


def _sublane_granularity(dtype):
    itemsize = jnp.dtype(dtype).itemsize
    return {4: 8, 2: 16, 1: 32}.get(itemsize, 8)


def _make_swish_kernel(compute_f32):
    def kernel(x_ref, o_ref):
        x = x_ref[...]
        if compute_f32:
            x = x.astype(jnp.float32)
        # Exact sigmoid; exp -> EUP, add/div/mul -> VPU.  HBM-bound overall.
        sig = 1.0 / (1.0 + jnp.exp(-x))
        o_ref[...] = (x * sig).astype(o_ref.dtype)
    return kernel


class SwishPallas:
    """Pallas equivalent of the PyTorch Swish(nn.Module)."""

    def __init__(self, inplace=False):
        # JAX arrays are immutable; `inplace` is honored as buffer reuse via
        # input_output_aliases (values returned are identical either way).
        self.inplace = inplace

    def __call__(self, x):
        orig_shape = x.shape
        dtype = x.dtype
        if not jnp.issubdtype(dtype, jnp.floating):
            raise TypeError(f"Swish expects a floating dtype, got {dtype}")

        total = int(np.prod(orig_shape)) if len(orig_shape) else 1
        if total == 0:
            return x

        gen = _tpu_generation()
        # v5e and older have no bf16 VPU/EUP -> always compute in f32 there.
        compute_f32 = (dtype == jnp.float32) or gen < 6

        # ---- flatten to a lane-dense 2D slab (no pad in the common case) ----
        flat = x.reshape(-1)
        lanes = next((l for l in _LANE_CHOICES if total % l == 0), None)
        padded_total = total
        if lanes is None:
            # Rare ragged case (element count not a multiple of 128): pad the
            # tail (costs one extra HBM pass, only hit for odd shapes).
            # TODO(synk): switch this path to a 1-D masked-tail BlockSpec.
            lanes = 128
            padded_total = -(-total // lanes) * lanes
            flat = jnp.pad(flat, (0, padded_total - total))
        rows = padded_total // lanes
        x2d = flat.reshape(rows, lanes)

        # ---- dtype/generation-aware row tiling ------------------------------
        sub = _sublane_granularity(dtype)
        bytes_per_row = lanes * jnp.dtype(dtype).itemsize
        max_tile_rows = max(
            sub, (_target_tile_bytes(gen) // bytes_per_row) // sub * sub)

        if rows <= 2 * sub:
            tile_rows = rows            # tiny input: one full-extent block
        else:
            # Cap the tile so the grid has >= 2 steps: keeps DMA pipelining
            # alive and lets v7x megacore split the work across both TCs.
            cap = max(sub, (-(-rows // 2)) // sub * sub)
            tile_rows = min(max_tile_rows, cap)

        # Partial last block (rows % tile_rows != 0) is masked by Pallas —
        # safe for an elementwise op, no wrapper pad/slice needed.
        grid = (pl.cdiv(rows, tile_rows),)

        out2d = pl.pallas_call(
            _make_swish_kernel(compute_f32),
            out_shape=jax.ShapeDtypeStruct((rows, lanes), dtype),
            grid_spec=pltpu.PrefetchScalarGridSpec(
                num_scalar_prefetch=0,
                grid=grid,
                in_specs=[pl.BlockSpec((tile_rows, lanes), lambda i: (i, 0))],
                out_specs=pl.BlockSpec((tile_rows, lanes), lambda i: (i, 0)),
            ),
            compiler_params=pltpu.CompilerParams(
                dimension_semantics=("parallel",),
                vmem_limit_bytes=_VMEM_LIMIT_BYTES,
            ),
            # Reuse the input HBM buffer for the output when inplace was
            # requested (saves an allocation; elementwise-safe).
            input_output_aliases={0: 0} if self.inplace else {},
        )(x2d)

        out = out2d
        if padded_total != total:
            out = out.reshape(-1)[:total]
        return out.reshape(orig_shape)


if __name__ == "__main__":
    key = jax.random.PRNGKey(0)
    k1, k2 = jax.random.split(key)

    def ref_swish(v):
        return v * jax.nn.sigmoid(v)

    # 1) Typical small ASR conv activation (N, C, H, W) — single-block path.
    x1 = jax.random.normal(k1, (2, 4, 16, 16), dtype=jnp.float32)
    y1 = SwishPallas()(x1)
    jax.block_until_ready(y1)
    assert y1.shape == x1.shape, y1.shape
    assert y1.dtype == x1.dtype, y1.dtype
    np.testing.assert_allclose(np.asarray(y1), np.asarray(ref_swish(x1)),
                               rtol=1e-6, atol=1e-6)

    # 2) Multi-block path with a masked partial last block + inplace aliasing.
    x2 = jax.random.normal(k2, (2, 4, 30, 64), dtype=jnp.float32)
    ref2 = np.asarray(ref_swish(x2))
    y2 = SwishPallas(inplace=True)(x2)
    jax.block_until_ready(y2)
    assert y2.shape == x2.shape, y2.shape
    np.testing.assert_allclose(np.asarray(y2), ref2, rtol=1e-6, atol=1e-6)

    print("KERNEL_OK")
</pallas_src>

<mosaic_0001>
module attributes {stable_mosaic.version = 11 : i64} {
  func.func @kernel(%arg0: i32, %arg1: memref<4x512xf32, #tpu.memory_space<vmem>>, %arg2: memref<4x512xf32, #tpu.memory_space<vmem>>) attributes {dimension_semantics = [#tpu.dimension_semantics<parallel>], iteration_bounds = array<i64: 1>, scalar_prefetch = 0 : i64, scratch_operands = 0 : i64, tpu.core_type = #tpu.core_type<tc>, window_params = [{transform_indices = @transform_0, window_bounds = array<i64: 4, 512>}, {transform_indices = @transform_1, window_bounds = array<i64: 4, 512>}]} {
    %c0 = arith.constant 0 : index
    %c0_0 = arith.constant 0 : index
    %0 = vector.load %arg1[%c0, %c0_0] : memref<4x512xf32, #tpu.memory_space<vmem>>, vector<4x512xf32>
    %cst = arith.constant 0.000000e+00 : f32
    %1 = vector.broadcast %cst : f32 to vector<4x512xf32>
    %2 = arith.subf %1, %0 : vector<4x512xf32>
    %3 = math.exp %2 : vector<4x512xf32>
    %cst_1 = arith.constant 1.000000e+00 : f32
    %4 = vector.broadcast %cst_1 : f32 to vector<4x512xf32>
    %5 = arith.addf %4, %3 : vector<4x512xf32>
    %cst_2 = arith.constant 1.000000e+00 : f32
    %6 = vector.broadcast %cst_2 : f32 to vector<4x512xf32>
    %7 = arith.divf %6, %5 : vector<4x512xf32>
    %8 = arith.mulf %0, %7 : vector<4x512xf32>
    %c0_3 = arith.constant 0 : index
    %c0_4 = arith.constant 0 : index
    %9 = vector.load %arg2[%c0_3, %c0_4] : memref<4x512xf32, #tpu.memory_space<vmem>>, vector<4x512xf32>
    tpu.vector_store %arg2[%c0_3, %c0_4], %8 {strides = array<i32>} : memref<4x512xf32, #tpu.memory_space<vmem>>, vector<4x512xf32>,
    return
  }
  func.func @transform_0(%arg0: i32) -> (i32, i32) {
    %c0_i32 = arith.constant 0 : i32
    %c0_i32_0 = arith.constant 0 : i32
    return %arg0, %c0_i32 : i32, i32
  }
  func.func @transform_1(%arg0: i32) -> (i32, i32) {
    %c0_i32 = arith.constant 0 : i32
    %c0_i32_0 = arith.constant 0 : i32
    return %arg0, %c0_i32 : i32, i32
  }
}

</mosaic_0001>

<llo_original>
// kernel: tpu_custom_call.1
$region0: #{tpu_custom_call.1}
  #allocation0 [shape = 'u32[]', space=smem, size = 0x4, offset = 0x4, fixed_abs, tag = 'smem constant byte address 0x4 - core index']
  #allocation1 [shape = 'u32[144,128]{1,0:T(1,128)}', space=vmem, size = 0x12000, scoped, tag = 'internal scratch']
  %s0 = inlined_call_operand.hbm [shape: f32[4,512], index: 0, kind: input, shape index: {}]
  %s1 = inlined_call_operand.hbm [shape: f32[4,512], index: 1, kind: output, shape index: {}]
  %s2 = sld [smem:[#allocation0]]
  $region18: #{tpu_custom_call.1} parent=0
    _
  %s4 = ssub.s32 1, %s2
  %s5 = scalar_select 0, %s4, %s2
  $region1: #{tpu_custom_call.1} parent=0
    #allocation2 [shape = 'u8[8192]{0}', space=vmem, size = 0x2000, scoped, tag = 'input window, operand 0, single buffered']
    #allocation3 [shape = 's32[1]{0}', space=sflag, size = 0x4, scoped, tag = 'scoped memory for tpu_custom_call.1']
    #allocation4 [shape = 's32[1]{0}', space=sflag, size = 0x4, scoped, tag = 'scoped memory for tpu_custom_call.1']
    #allocation5 [shape = 'u8[8192]{0}', space=vmem, size = 0x2000, scoped, tag = 'output window, operand 0, single buffered']
    %6 = vsyncpa [#allocation3], 0
    %7 = vsyncpa [#allocation4], 0
    // Predicated region
    $region2: #{tpu_custom_call.1} parent=1 // pred_check
      _
    $region3: #{tpu_custom_call.1} parent=1 // pred_check_branch
      %9 = sbr.rel (0) target = $region5
    $region4: #{tpu_custom_call.1} parent=1 // pred_region
      %s11 = ssub.s32 256, 256
      %12 = vsyncadd [#allocation3], %s11
      %s14 = sshll.u32 [#allocation2], 4
      %s15 = int_to_ptr.vmem [resolvable:$true] %s14
      %17 = dma.hbm_to_vmem [thread:$0]  %s0, 256, %s15, [#allocation3]
    $region5: #{tpu_custom_call.1} parent=1 // pred_fallthru
      _
    // Predicated region
    $region6: #{tpu_custom_call.1} parent=1 // pred_check
      _
    $region7: #{tpu_custom_call.1} parent=1 // pred_check_branch
      %19 = sbr.rel (0) target = $region9
    $region8: #{tpu_custom_call.1} parent=1 // pred_region
      %20 = dma.done [#allocation3], 256
    $region9: #{tpu_custom_call.1} parent=1 // pred_fallthru
      _
    %v21 = vld [vmem:[#allocation2] sm:$0xff]
    %v22 = vld [vmem:[#allocation2 + $0x8] sm:$0xff]
    %v23 = vsub.f32 0.0, %v21
    %v24 = vsub.f32 0.0, %v22
    %v25 = vmul.f32 %v23, 1.442695
    %v26 = vpow.pop %v25
    %v27 = vmul.f32 %v24, 1.442695
    %v28 = vpow.pop %v27
    %v29 = vadd.f32 %v26, 1.0
    %v30 = vadd.f32 %v28, 1.0
    %v31 = vrcp.pop %v29
    %v32 = vmul.f32 1.0, %v31
    %v33 = vrcp.pop %v30
    %v34 = vmul.f32 1.0, %v33
    %v35 = vmul.f32 %v21, %v32
    %v36 = vmul.f32 %v22, %v34
    %37 = vst [vmem:[#allocation5] sm:$0xff] %v35
    %38 = vst [vmem:[#allocation5 + $0x8] sm:$0xff] %v36
    // Predicated region
    $region10: #{tpu_custom_call.1} parent=1 // pred_check
      _
    $region11: #{tpu_custom_call.1} parent=1 // pred_check_branch
      %40 = sbr.rel (0) target = $region13
    $region12: #{tpu_custom_call.1} parent=1 // pred_region
      %s42 = ssub.s32 256, 256
      %43 = vsyncadd [#allocation4], %s42
      %s45 = sshll.u32 [#allocation5], 4
      %s46 = int_to_ptr.vmem [resolvable:$true] %s45
      %48 = dma.vmem_to_hbm [thread:$0]  %s46, 256, %s1, [#allocation4]
    $region13: #{tpu_custom_call.1} parent=1 // pred_fallthru
      _
    // Predicated region
    $region14: #{tpu_custom_call.1} parent=1 // pred_check
      _
    $region15: #{tpu_custom_call.1} parent=1 // pred_check_branch
      %50 = sbr.rel (0) target = $region17
    $region16: #{tpu_custom_call.1} parent=1 // pred_region
      %51 = dma.done [#allocation4], 256
    $region17: #{tpu_custom_call.1} parent=1 // pred_fallthru
      _
    %52 = vsyncpa [#allocation3], 1
    %53 = vsyncpa [#allocation4], 1

</llo_original>
